<compile_context>
chip_gen: v7x
topology: tpu7x:2x2x1
jax: 0.10.0
libtpu: 0.0.40
codegen_flags: <defaults>
</compile_context>

<pallas_src>
import math

import jax
import jax.numpy as jnp
from jax.experimental import pallas as pl
from jax.experimental.pallas import tpu as pltpu


# ---------------------------------------------------------------------------
# Kernel body: one MXU matmul (f32 accumulation), bias add on VPU, cast out.
# ---------------------------------------------------------------------------
def _linear_embedding_kernel(x_ref, w_ref, b_ref, o_ref):
    acc = jnp.dot(x_ref[...], w_ref[...], preferred_element_type=jnp.float32)
    o_ref[...] = (acc + b_ref[...]).astype(o_ref.dtype)


def _round_up(n, m):
    return ((n + m - 1) // m) * m


# VMEM / tiling policy (conservative across v5e / v6e / v7x).
_VMEM_LIMIT_BYTES = 32 * 1024 * 1024   # explicit: raises v5e's 16 MiB default,
                                        # matches v6e/v7x default scoped limit.
_VMEM_TILE_BUDGET = 24 * 1024 * 1024   # head-room under the limit above.
_SLAB_TARGET_BYTES = 4 * 1024 * 1024   # ~2-8 MiB of (in+out) per grid step.
_MIN_GRID_STEPS = 4                    # keep both v7x TCs + pipeline busy.


def _choose_packing(inp_size, d_model, n_rows):
    """Rows packed per kernel row so the stored last dim is 256 lanes
    (v6e / v7x MXU width) or 128 lanes.  Guarded so the block-diagonal weight
    stays within one MXU K-pass (g*K <= 256) and the packed row count divides
    exactly (no padding / tail copies); otherwise fall back to g=1."""
    for lanes in (256, 128):
        if d_model <= lanes and lanes % d_model == 0:
            g = lanes // d_model
            if g == 1:
                return 1
            if g * inp_size <= 256 and n_rows % g == 0:
                return g
    return 1


def _pick_tile_m(m_rows, kb, nb, in_bytes, out_bytes):
    """Largest row tile such that everything resident in VMEM fits the budget
    (double-buffered x/out slabs, the f32 accumulator intermediate, and the
    resident weight + bias), the per-step slab is a few MiB, and the grid
    keeps >= _MIN_GRID_STEPS steps when there is enough work."""
    if m_rows <= 8:
        return m_rows                                   # single full block
    row_io = kb * in_bytes + nb * out_bytes             # HBM bytes per row
    row_vmem = 2 * kb * in_bytes + 2 * nb * out_bytes + 4 * nb  # + f32 acc
    fixed = 2 * (kb * nb * in_bytes + nb * 4)            # weight + bias copies
    tm_vmem = (_VMEM_TILE_BUDGET - fixed) // max(row_vmem, 1)
    tm_slab = _SLAB_TARGET_BYTES // max(row_io, 1)
    tm_steps = _round_up(pl.cdiv(m_rows, _MIN_GRID_STEPS), 8)
    tm = max(8, min(tm_vmem, tm_slab, tm_steps))
    tm = (tm // 8) * 8                                   # sublane-aligned
    if tm >= m_rows:
        return m_rows
    return int(tm)


# ---------------------------------------------------------------------------
# One-time parameter preparation (hoisted out of the per-forward path).
# ---------------------------------------------------------------------------
def pack_linear_embedding_params(weight, bias, d_model, n_rows, *, param_dtype):
    """weight: (d_model, inp_size), bias: (d_model,).  Returns (w_big, b_big, g).

    Folds sqrt(d_model) into the parameters, transposes the weight for the
    MXU, and (when profitable) builds a block-diagonal weight that packs
    g logical rows per kernel row for a lane-dense 128/256-wide output."""
    d_model_w, inp_size = weight.shape
    assert d_model_w == d_model
    scale = math.sqrt(d_model)
    w_t = weight.T.astype(jnp.float32) * scale            # (K, N)
    b_s = bias.astype(jnp.float32) * scale                # (N,)

    g = _choose_packing(inp_size, d_model, n_rows)
    if g > 1:
        # Block-diagonal: packed input row @ w_big == g independent rows.
        w_big = jnp.kron(jnp.eye(g, dtype=jnp.float32), w_t)   # (g*K, g*N)
        b_big = jnp.tile(b_s, (g,))                            # (g*N,)
    else:
        w_big, b_big = w_t, b_s

    # Weight streams in the activation dtype (MXU-native if bf16); bias stays
    # f32 so the add happens in the f32 accumulator before the output cast.
    return w_big.astype(param_dtype), b_big.reshape(1, -1), g


# ---------------------------------------------------------------------------
# Forward pass (just reshape + pallas_call).
# ---------------------------------------------------------------------------
def linear_embedding_apply(x, w_big, b_big, g, d_model):
    """x: (batch, seq, inp_size) -> (batch, seq, d_model)."""
    batch, seq, inp_size = x.shape
    M = batch * seq
    assert M % g == 0, "packing factor must divide batch*seq"
    kb = g * inp_size
    nb = g * d_model
    m_rows = M // g

    in_bytes = jnp.dtype(x.dtype).itemsize
    out_bytes = in_bytes
    weight_bytes = kb * nb * jnp.dtype(w_big.dtype).itemsize
    if 2 * weight_bytes > _VMEM_TILE_BUDGET:
        # Weight itself doesn't fit VMEM (would need K/N tiling) - not this
        # layer's regime (inp_size is tiny); fall back to plain XLA.
        out = (x.reshape(m_rows, kb).astype(jnp.float32) @ w_big.astype(jnp.float32)
               + b_big).astype(x.dtype)
        return out.reshape(batch, seq, d_model)

    # Pure bitcast reshape: g consecutive logical rows concatenated along K.
    x_packed = x.reshape(m_rows, kb)

    tm = _pick_tile_m(m_rows, kb, nb, in_bytes, out_bytes)
    grid = (pl.cdiv(m_rows, tm),)   # ragged tail handled by Pallas masking

    out_packed = pl.pallas_call(
        _linear_embedding_kernel,
        out_shape=jax.ShapeDtypeStruct((m_rows, nb), x.dtype),
        grid_spec=pltpu.PrefetchScalarGridSpec(
            num_scalar_prefetch=0,
            grid=grid,
            in_specs=[
                pl.BlockSpec((tm, kb), lambda i: (i, 0)),   # activations: tiled over M
                pl.BlockSpec((kb, nb), lambda i: (0, 0)),   # weight: VMEM-resident
                pl.BlockSpec((1, nb), lambda i: (0, 0)),    # bias: VMEM-resident
            ],
            out_specs=pl.BlockSpec((tm, nb), lambda i: (i, 0)),
        ),
        compiler_params=pltpu.CompilerParams(
            # M tiles are independent -> shard across both TCs on v7x.
            dimension_semantics=("parallel",),
            vmem_limit_bytes=_VMEM_LIMIT_BYTES,
        ),
    )(x_packed, w_big, b_big)

    # Pure bitcast reshape back to logical rows.
    return out_packed.reshape(batch, seq, d_model)


def linear_embedding(x, weight, bias, d_model):
    """Convenience one-shot wrapper (prep + apply).  For repeated forwards,
    call pack_linear_embedding_params() once and linear_embedding_apply()."""
    batch, seq, _ = x.shape
    w_big, b_big, g = pack_linear_embedding_params(
        weight, bias, d_model, batch * seq, param_dtype=x.dtype)
    return linear_embedding_apply(x, w_big, b_big, g, d_model)


if __name__ == "__main__":
    # Small shapes consistent with LinearEmbedding's forward:
    # trajectory-style input (batch, seq, inp_size) -> (batch, seq, d_model).
    batch, seq, inp_size, d_model = 2, 8, 4, 32

    key = jax.random.PRNGKey(0)
    kx, kw, kb = jax.random.split(key, 3)

    x = jax.random.normal(kx, (batch, seq, inp_size), dtype=jnp.float32)
    # Deterministic synthetic parameters (nn.Linear(inp_size, d_model) shapes).
    bound = 1.0 / math.sqrt(inp_size)
    weight = jax.random.uniform(kw, (d_model, inp_size),
                                minval=-bound, maxval=bound, dtype=jnp.float32)
    bias = jax.random.uniform(kb, (d_model,),
                              minval=-bound, maxval=bound, dtype=jnp.float32)

    # Hoisted one-time parameter prep, then the kernel forward.
    w_big, b_big, g = pack_linear_embedding_params(
        weight, bias, d_model, batch * seq, param_dtype=x.dtype)
    out = linear_embedding_apply(x, w_big, b_big, g, d_model)
    out = jax.block_until_ready(out)

    # Reference check against plain JAX (same math as the PyTorch forward).
    # Note: the kernel folds sqrt(d_model) into the params and accumulates on
    # the MXU in f32; tolerance reflects that rather than bit-exact parity.
    ref = (x @ weight.T + bias) * math.sqrt(d_model)
    assert out.shape == (batch, seq, d_model)
    assert jnp.allclose(out, ref, atol=1e-4, rtol=1e-4)

    print("KERNEL_OK")
</pallas_src>

<mosaic_0001>
module attributes {stable_mosaic.version = 11 : i64} {
  func.func @_linear_embedding_kernel(%arg0: i32, %arg1: memref<2x32xf32, #tpu.memory_space<vmem>>, %arg2: memref<32x256xf32, #tpu.memory_space<vmem>>, %arg3: memref<1x256xf32, #tpu.memory_space<vmem>>, %arg4: memref<2x256xf32, #tpu.memory_space<vmem>>) attributes {dimension_semantics = [#tpu.dimension_semantics<parallel>], iteration_bounds = array<i64: 1>, scalar_prefetch = 0 : i64, scratch_operands = 0 : i64, tpu.core_type = #tpu.core_type<tc>, window_params = [{transform_indices = @transform_0, window_bounds = array<i64: 2, 32>}, {pipeline_mode = #tpu.pipeline_mode<synchronous>, transform_indices = @transform_1, window_bounds = array<i64: 32, 256>}, {pipeline_mode = #tpu.pipeline_mode<synchronous>, transform_indices = @transform_2, window_bounds = array<i64: 1, 256>}, {transform_indices = @transform_3, window_bounds = array<i64: 2, 256>}]} {
    %c0 = arith.constant 0 : index
    %c0_0 = arith.constant 0 : index
    %0 = vector.load %arg1[%c0, %c0_0] : memref<2x32xf32, #tpu.memory_space<vmem>>, vector<2x32xf32>
    %c0_1 = arith.constant 0 : index
    %c0_2 = arith.constant 0 : index
    %1 = vector.load %arg2[%c0_1, %c0_2] : memref<32x256xf32, #tpu.memory_space<vmem>>, vector<32x256xf32>
    %cst = arith.constant dense<0.000000e+00> : vector<2x256xf32>
    %2 = tpu.matmul %0, %1, %cst {dimension_numbers = #tpu.dot_dimension_numbers<[1], [0], [0], [1], [0, 0, 1, 1], [], []>} : vector<2x32xf32>, vector<32x256xf32>, vector<2x256xf32> -> vector<2x256xf32>
    %c0_3 = arith.constant 0 : index
    %c0_4 = arith.constant 0 : index
    %3 = vector.load %arg3[%c0_3, %c0_4] : memref<1x256xf32, #tpu.memory_space<vmem>>, vector<1x256xf32>
    %4 = vector.broadcast %3 : vector<1x256xf32> to vector<2x256xf32>
    %5 = arith.addf %2, %4 : vector<2x256xf32>
    %c0_5 = arith.constant 0 : index
    %c0_6 = arith.constant 0 : index
    %6 = vector.load %arg4[%c0_5, %c0_6] : memref<2x256xf32, #tpu.memory_space<vmem>>, vector<2x256xf32>
    tpu.vector_store %arg4[%c0_5, %c0_6], %5 {strides = array<i32>} : memref<2x256xf32, #tpu.memory_space<vmem>>, vector<2x256xf32>,
    return
  }
  func.func @transform_0(%arg0: i32) -> (i32, i32) {
    %c0_i32 = arith.constant 0 : i32
    %c0_i32_0 = arith.constant 0 : i32
    return %arg0, %c0_i32 : i32, i32
  }
  func.func @transform_1(%arg0: i32) -> (i32, i32) {
    %c0_i32 = arith.constant 0 : i32
    %c0_i32_0 = arith.constant 0 : i32
    %c0_i32_1 = arith.constant 0 : i32
    return %c0_i32, %c0_i32_0 : i32, i32
  }
  func.func @transform_2(%arg0: i32) -> (i32, i32) {
    %c0_i32 = arith.constant 0 : i32
    %c0_i32_0 = arith.constant 0 : i32
    %c0_i32_1 = arith.constant 0 : i32
    return %c0_i32, %c0_i32_0 : i32, i32
  }
  func.func @transform_3(%arg0: i32) -> (i32, i32) {
    %c0_i32 = arith.constant 0 : i32
    %c0_i32_0 = arith.constant 0 : i32
    return %arg0, %c0_i32 : i32, i32
  }
}

</mosaic_0001>

<llo_original>
// kernel: tpu_custom_call.1
$region0: #{tpu_custom_call.1}
  #allocation0 [shape = 'u32[]', space=smem, size = 0x4, offset = 0x4, fixed_abs, tag = 'smem constant byte address 0x4 - core index']
  #allocation1 [shape = 'u32[144,128]{1,0:T(1,128)}', space=vmem, size = 0x12000, scoped, tag = 'internal scratch']
  %s0 = inlined_call_operand.hbm [shape: f32[2,32], index: 0, kind: input, shape index: {}]
  %s1 = inlined_call_operand.hbm [shape: f32[32,256], index: 1, kind: input, shape index: {}]
  %s2 = inlined_call_operand.vmem [shape: f32[1,256], index: 2, kind: input, shape index: {}]
  %s3 = inlined_call_operand.hbm [shape: f32[2,256], index: 3, kind: output, shape index: {}]
  %s4 = sld [smem:[#allocation0]]
  $region30: #{tpu_custom_call.1} parent=0
    _
  %s6 = ssub.s32 1, %s4
  %s7 = scalar_select 0, %s6, %s4
  $region1: #{tpu_custom_call.1} parent=0
    #allocation2 [shape = 'u8[1024]{0}', space=vmem, size = 0x400, scoped, tag = 'input window, operand 0, single buffered']
    #allocation3 [shape = 's32[1]{0}', space=sflag, size = 0x4, scoped, tag = 'scoped memory for tpu_custom_call.1']
    #allocation4 [shape = 's32[1]{0}', space=sflag, size = 0x4, scoped, tag = 'scoped memory for tpu_custom_call.1']
    #allocation5 [shape = 'u8[32768]{0}', space=vmem, size = 0x8000, scoped, tag = 'input window, operand 1, single buffered']
    #allocation6 [shape = 's32[1]{0}', space=sflag, size = 0x4, scoped, tag = 'scoped memory for tpu_custom_call.1']
    #allocation7 [shape = 'u8[2048]{0}', space=vmem, size = 0x800, scoped, tag = 'output window, operand 0, single buffered']
    %8 = vsyncpa [#allocation3], 0
    %9 = vsyncpa [#allocation6], 0
    %10 = vsyncpa [#allocation4], 0
    // Predicated region
    $region2: #{tpu_custom_call.1} parent=1 // pred_check
      _
    $region3: #{tpu_custom_call.1} parent=1 // pred_check_branch
      %12 = sbr.rel (0) target = $region5
    $region4: #{tpu_custom_call.1} parent=1 // pred_region
      %s14 = ssub.s32 32, 32
      %15 = vsyncadd [#allocation3], %s14
      %s17 = sshll.u32 [#allocation2], 4
      %s18 = int_to_ptr.vmem [resolvable:$true] %s17
      %20 = dma.hbm_to_vmem [thread:$0]  %s0, 32, %s18, [#allocation3]
    $region5: #{tpu_custom_call.1} parent=1 // pred_fallthru
      _
    // Predicated region
    $region6: #{tpu_custom_call.1} parent=1 // pred_check
      _
    $region7: #{tpu_custom_call.1} parent=1 // pred_check_branch
      %22 = sbr.rel (0) target = $region9
    $region8: #{tpu_custom_call.1} parent=1 // pred_region
      %s24 = ssub.s32 1024, 1024
      %25 = vsyncadd [#allocation6], %s24
      %s26 = sshll.u32 [#allocation5], 4
      %s27 = int_to_ptr.vmem [resolvable:$true] %s26
      %32 = dma.hbm_to_vmem [thread:$0]  %s1, 1024, %s27, [#allocation6], 256, 256, 16
    $region9: #{tpu_custom_call.1} parent=1 // pred_fallthru
      _
    // Predicated region
    $region10: #{tpu_custom_call.1} parent=1 // pred_check
      _
    $region11: #{tpu_custom_call.1} parent=1 // pred_check_branch
      %34 = sbr.rel (0) target = $region13
    $region12: #{tpu_custom_call.1} parent=1 // pred_region
      _
    $region13: #{tpu_custom_call.1} parent=1 // pred_fallthru
      _
    // Predicated region
    $region14: #{tpu_custom_call.1} parent=1 // pred_check
      _
    $region15: #{tpu_custom_call.1} parent=1 // pred_check_branch
      %36 = sbr.rel (0) target = $region17
    $region16: #{tpu_custom_call.1} parent=1 // pred_region
      %37 = dma.done [#allocation3], 32
    $region17: #{tpu_custom_call.1} parent=1 // pred_fallthru
      _
    // Predicated region
    $region18: #{tpu_custom_call.1} parent=1 // pred_check
      _
    $region19: #{tpu_custom_call.1} parent=1 // pred_check_branch
      %39 = sbr.rel (0) target = $region21
    $region20: #{tpu_custom_call.1} parent=1 // pred_region
      %40 = dma.done [#allocation6], 1024
    $region21: #{tpu_custom_call.1} parent=1 // pred_fallthru
      _
    %v41 = vld [vmem:[#allocation2] sm:$0x3]
    %v42 = vld [vmem:[#allocation5] sm:$0xff]
    %v43 = vld [vmem:[#allocation5 + $0x8] sm:$0xff]
    %v44 = vld [vmem:[#allocation5 + $0x10] sm:$0xff]
    %v45 = vld [vmem:[#allocation5 + $0x18] sm:$0xff]
    %v46 = vld [vmem:[#allocation5 + $0x20] sm:$0xff]
    %v47 = vld [vmem:[#allocation5 + $0x28] sm:$0xff]
    %v48 = vld [vmem:[#allocation5 + $0x30] sm:$0xff]
    %v49 = vld [vmem:[#allocation5 + $0x38] sm:$0xff]
    %v50 = vld [vmem:[%s2] sm:$0x3]
    %v52 = vlaneseq
    %v53 = vshrl.u32 %v52, 7
    %v54 = vsub.s32 0, %v53
    %v55 = vrot.slane %v50, %v54
    %v56 = vlaneseq
    %v57 = vshrl.u32 %v56, 7
    %v58 = vsub.s32 1, %v57
    %v59 = vrot.slane %v50, %v58
    %vm62 = vcmask 261120
    %v64 = vsel %vm62, %v41, 0
    %66 = vmatprep.subr.mxu0 %v43
    %67 = vmatpush1.msra.mxu0 %v42
    %68 = vmatprep.subr.mxu0 %v45
    %69 = vmatpush1.msra.mxu0 %v44
    %70 = vmatprep.subr.mxu0 %v47
    %71 = vmatpush1.msra.mxu0 %v46
    %72 = vmatprep.subr.mxu0 %v49
    %73 = vmatpush1.msra.mxu0 %v48
    %74 = vmatprep.subr.mxu0 0.0
    %75 = vmatpush1.msra.mxu0 0.0
    %76 = vmatprep.subr.mxu0 0.0
    %77 = vmatpush1.msra.mxu0 0.0
    %78 = vmatprep.subr.mxu0 0.0
    %79 = vmatpush1.msra.mxu0 0.0
    %80 = vmatprep.subr.mxu0 0.0
    %81 = vmatpush1.msra.mxu0 0.0
    %82 = vmatprep.subr.mxu0 0.0
    %83 = vmatpush1.msra.mxu0 0.0
    %84 = vmatprep.subr.mxu0 0.0
    %85 = vmatpush1.msra.mxu0 0.0
    %86 = vmatprep.subr.mxu0 0.0
    %87 = vmatpush1.msra.mxu0 0.0
    %88 = vmatprep.subr.mxu0 0.0
    %89 = vmatpush1.msra.mxu0 0.0
    %90 = vmatprep.subr.mxu0 0.0
    %91 = vmatpush1.msra.mxu0 0.0
    %92 = vmatprep.subr.mxu0 0.0
    %93 = vmatpush1.msra.mxu0 0.0
    %94 = vmatprep.subr.mxu0 0.0
    %95 = vmatpush1.msra.mxu0 0.0
    %96 = vmatprep.subr.mxu0 0.0
    %97 = vmatpush1.msra.mxu0 0.0
    %98 = vmatprep.subr.mxu0 0.0
    %99 = vmatpush1.msra.mxu0 0.0
    %100 = vmatprep.subr.mxu0 0.0
    %101 = vmatpush1.msra.mxu0 0.0
    %102 = vmatprep.subr.mxu0 0.0
    %103 = vmatpush1.msra.mxu0 0.0
    %104 = vmatprep.subr.mxu0 0.0
    %105 = vmatpush1.msra.mxu0 0.0
    %106 = vmatprep.subr.mxu0 0.0
    %107 = vmatpush1.msra.mxu0 0.0
    %108 = vmatprep.subr.mxu0 0.0
    %109 = vmatpush1.msra.mxu0 0.0
    %110 = vmatprep.subr.mxu0 0.0
    %111 = vmatpush1.msra.mxu0 0.0
    %112 = vmatprep.subr.mxu0 0.0
    %113 = vmatpush1.msra.mxu0 0.0
    %114 = vmatprep.subr.mxu0 0.0
    %115 = vmatpush1.msra.mxu0 0.0
    %116 = vmatprep.subr.mxu0 0.0
    %117 = vmatpush1.msra.mxu0 0.0
    %118 = vmatprep.subr.mxu0 0.0
    %119 = vmatpush1.msra.mxu0 0.0
    %120 = vmatprep.subr.mxu0 0.0
    %121 = vmatpush1.msra.mxu0 0.0
    %122 = vmatprep.subr.mxu0 0.0
    %123 = vmatpush1.msra.mxu0 0.0
    %124 = vmatprep.subr.mxu0 0.0
    %125 = vmatpush1.msra.mxu0 0.0
    %126 = vmatprep.subr.mxu0 0.0
    %127 = vmatpush1.msra.mxu0 0.0
    %128 = vmatprep.subr.mxu0 0.0
    %129 = vmatpush1.msra.mxu0 0.0
    %130 = vmatprep.mubr.f32.mxu0 0.0
    %131 = vmatmul.mubr.f32.gmra.mrb[0].mxu0 %v64
    %v132 = vpop.f32.mrb[0].mxu0
    %v133 = vadd.f32 %v55, %v132
    %v134 = vpop.f32.mrb[0].mxu0
    %v135 = vadd.f32 %v59, %v134
    %136 = vdwg.mxu0
    %v139 = vcombine.low %v133, %v135
    %v141 = vunpack.c.l.s4 1983009808
    %v142 = vunpack.c.0.s8 %v141
    %v143 = vlaneseq
    %v144 = vshrl.u32 %v143, 7
    %v145 = vsub.s32 %v142, %v144
    %v146 = vrot.slane %v139, %v145
    %148 = vst [vmem:[#allocation7] sm:$0xf] %v146
    // Predicated region
    $region22: #{tpu_custom_call.1} parent=1 // pred_check
      _
    $region23: #{tpu_custom_call.1} parent=1 // pred_check_branch
      %150 = sbr.rel (0) target = $region25
    $region24: #{tpu_custom_call.1} parent=1 // pred_region
      %s152 = ssub.s32 64, 64
      %153 = vsyncadd [#allocation4], %s152
      %s155 = sshll.u32 [#allocation7], 4
      %s156 = int_to_ptr.vmem [resolvable:$true] %s155
      %158 = dma.vmem_to_hbm [thread:$0]  %s156, 64, %s3, [#allocation4]
    $region25: #{tpu_custom_call.1} parent=1 // pred_fallthru
      _
    // Predicated region
    $region26: #{tpu_custom_call.1} parent=1 // pred_check
      _
    $region27: #{tpu_custom_call.1} parent=1 // pred_check_branch
      %160 = sbr.rel (0) target = $region29
    $region28: #{tpu_custom_call.1} parent=1 // pred_region
      %161 = dma.done [#allocation4], 64
    $region29: #{tpu_custom_call.1} parent=1 // pred_fallthru
      _
    %162 = vsyncpa [#allocation3], 1
    %163 = vsyncpa [#allocation6], 1
    %164 = vsyncpa [#allocation4], 1

</llo_original>
